<compile_context>
chip_gen: v7x
topology: tpu7x:2x2x1
jax: 0.10.0
libtpu: 0.0.40
codegen_flags: <defaults>
</compile_context>

<pallas_src>
import jax
import jax.numpy as jnp
from jax.experimental import pallas as pl
from jax.experimental.pallas import tpu as pltpu

LEAKY_SLOPE = 0.2
BN_EPS = 1e-5


def _round_up(n, m):
    return (n + m - 1) // m * m


def _leaky_relu(x):
    return jnp.where(x >= 0, x, LEAKY_SLOPE * x)


# --------------------------------- kernel ---------------------------------

def _encoder_kernel(
    x_ref, w1_ref, b1_ref, g1_ref, be1_ref,
    w2_ref, b2_ref, g2_ref, be2_ref,
    wh_ref, bh_ref,
    out_ref,
    acc_ref,
):
    """K-tiled first Linear; BN / layer-2 / fused-head epilogue on the last tile."""
    k = pl.program_id(0)

    @pl.when(k == 0)
    def _():
        acc_ref[...] = jnp.zeros_like(acc_ref)

    # Stream (B, tk) @ (tk, H0p) partial products into the f32 accumulator.
    # Native bf16 x bf16 MXU matmul: cast only the small LHS tile, keep the
    # streamed bf16 weight tile as-is, accumulate in f32.
    acc_ref[...] += jnp.dot(
        x_ref[...].astype(jnp.bfloat16), w1_ref[...],
        preferred_element_type=jnp.float32)

    @pl.when(k == pl.num_programs(0) - 1)
    def _():
        def act_bn(z, g, be):
            # LeakyReLU(0.2) (VPU) + BatchNorm1d training mode with batch stats.
            # One-pass stats: var = max(E[x^2] - mu^2, 0), biased (PyTorch).
            z = _leaky_relu(z)
            inv_b = 1.0 / z.shape[0]
            mu = jnp.sum(z, axis=0, keepdims=True) * inv_b
            ex2 = jnp.sum(z * z, axis=0, keepdims=True) * inv_b
            var = jnp.maximum(ex2 - mu * mu, 0.0)
            return (z - mu) * jax.lax.rsqrt(var + BN_EPS) * g + be

        h1 = act_bn(acc_ref[...] + b1_ref[...], g1_ref[...], be1_ref[...])
        z2 = jnp.dot(h1.astype(jnp.bfloat16), w2_ref[...],
                     preferred_element_type=jnp.float32) + b2_ref[...]
        h2 = act_bn(z2, g2_ref[...], be2_ref[...])
        # Fused mean/log_var head: single MXU push, single lane-dense store.
        out_ref[...] = (
            jnp.dot(h2.astype(jnp.bfloat16), wh_ref[...],
                    preferred_element_type=jnp.float32) + bh_ref[...]
        ).astype(out_ref.dtype)


# -------------------------------- wrapper ---------------------------------

def _pad2(a, rows, cols, fill=0.0):
    r, c = a.shape
    if (r, c) == (rows, cols):
        return a
    return jnp.pad(a, ((0, rows - r), (0, cols - c)), constant_values=fill)


def _pick_tk(Kp, H0p, target_tile_bytes=4 * 1024 * 1024):
    """Largest K tile from {2048,...,128} that divides Kp and keeps the streamed
    bf16 w1 tile within ~target_tile_bytes (amortizes per-grid-step overhead)."""
    for cand in (2048, 1024, 512, 256, 128):
        if Kp % cand == 0 and cand * H0p * 2 <= target_tile_bytes:
            return cand
    return 128


def _const_spec(shape):
    """Grid-invariant input: single-buffered to halve its VMEM footprint."""
    if hasattr(pl, "Buffered"):
        try:
            return pl.BlockSpec(shape, lambda k: (0, 0),
                                pipeline_mode=pl.Buffered(1))
        except TypeError:
            pass
    return pl.BlockSpec(shape, lambda k: (0, 0))


def encoder_forward(x, params):
    """Calls the Pallas kernel. x: (B, input_dim) float32 -> (mean, log_var)."""
    B, K = x.shape
    H0 = params["w1"].shape[1]
    H1 = params["w2"].shape[1]
    L = params["wm"].shape[1]

    # Lane-dense padded sizes. mean / log_var each get their own 128-aligned
    # slab so both wrapper slices below are lane-aligned.
    Kp = _round_up(K, 128)
    H0p = _round_up(H0, 128)
    H1p = _round_up(H1, 128)
    Lp = _round_up(L, 128)
    L2p = 2 * Lp

    tk = _pick_tk(Kp, H0p)

    # Zero-padding keeps the math exact: padded input columns hit zero weight
    # rows; padded hidden features are exactly 0 after BN (0-mean, 0-var) and are
    # multiplied by zero weight rows in the next layer; padded head columns are
    # sliced off below.
    x_p = _pad2(x.astype(jnp.float32), B, Kp)
    w1 = _pad2(params["w1"], Kp, H0p)
    b1 = _pad2(params["b1"], 1, H0p)
    g1 = _pad2(params["g1"], 1, H0p, fill=1.0)
    be1 = _pad2(params["be1"], 1, H0p)
    w2 = _pad2(params["w2"], H0p, H1p)
    b2 = _pad2(params["b2"], 1, H1p)
    g2 = _pad2(params["g2"], 1, H1p, fill=1.0)
    be2 = _pad2(params["be2"], 1, H1p)
    wh = jnp.concatenate([_pad2(params["wm"], H1p, Lp),
                          _pad2(params["wv"], H1p, Lp)], axis=1)
    bh = jnp.concatenate([_pad2(params["bm"], 1, Lp),
                          _pad2(params["bv"], 1, Lp)], axis=1)

    args = (x_p, w1, b1, g1, be1, w2, b2, g2, be2, wh, bh)

    in_specs = [
        pl.BlockSpec((B, tk), lambda k: (0, k)),    # x : stream K tiles
        pl.BlockSpec((tk, H0p), lambda k: (k, 0)),  # w1: stream K tiles (bf16)
        _const_spec((1, H0p)), _const_spec((1, H0p)), _const_spec((1, H0p)),
        _const_spec((H0p, H1p)),                    # w2 (resident, bf16)
        _const_spec((1, H1p)), _const_spec((1, H1p)), _const_spec((1, H1p)),
        _const_spec((H1p, L2p)),                    # fused head weight (bf16)
        _const_spec((1, L2p)),                      # fused head bias
    ]
    out_spec = pl.BlockSpec((B, L2p), lambda k: (0, 0))   # resident over K

    # VMEM budget: streamed tiles are double-buffered, constants single-buffered.
    need = (
        2 * (B * tk * 4 + tk * H0p * 2)           # streamed x + w1 tiles
        + 3 * H0p * 4 + 3 * H1p * 4               # bias / BN rows
        + H0p * H1p * 2 + H1p * L2p * 2 + L2p * 4  # resident w2, wh, bh
        + B * H0p * 4                              # f32 accumulator scratch
        + 2 * B * L2p * 4                          # output buffers
    )
    try:
        phys_vmem = int(pltpu.get_tpu_info().vmem_capacity_bytes)
    except Exception:  # conservative default = v7x (64 MiB per TensorCore)
        phys_vmem = 64 * 1024 * 1024
    vmem_cap = int(phys_vmem * 0.85)
    vmem_limit = min(max(int(need * 1.5), 32 * 1024 * 1024), vmem_cap)

    flops = 2 * B * (Kp * H0p + H0p * H1p + H1p * L2p)
    bytes_accessed = sum(int(a.size) * a.dtype.itemsize for a in args) + B * L2p * 4
    cost = pl.CostEstimate(flops=flops,
                           transcendentals=H0p + H1p,     # rsqrt per BN feature
                           bytes_accessed=bytes_accessed)

    grid_spec = pltpu.PrefetchScalarGridSpec(
        num_scalar_prefetch=0,
        grid=(Kp // tk,),
        in_specs=in_specs,
        out_specs=out_spec,
        scratch_shapes=[pltpu.VMEM((B, H0p), jnp.float32)],
    )

    out_p = pl.pallas_call(
        _encoder_kernel,
        out_shape=jax.ShapeDtypeStruct((B, L2p), jnp.float32),
        grid_spec=grid_spec,
        compiler_params=pltpu.CompilerParams(
            dimension_semantics=("arbitrary",),   # K axis is a reduction
            vmem_limit_bytes=vmem_limit,
        ),
        cost_estimate=cost,
    )(*args)

    mean = out_p[:, :L]            # lane-aligned slice start (0)
    log_var = out_p[:, Lp:Lp + L]  # lane-aligned slice start (Lp % 128 == 0)
    return mean, log_var


# ------------------------- deterministic parameter init -------------------------

def xavier_uniform(key, fan_in, fan_out):
    """Matches nn.init.xavier_uniform_ on a (out,in) matrix; returned as (in,out)."""
    bound = (6.0 / (fan_in + fan_out)) ** 0.5
    w = jax.random.uniform(key, (fan_out, fan_in), jnp.float32, -bound, bound)
    return w.T  # store transposed: (in, out)


def linear_bias(key, fan_in, fan_out):
    """PyTorch Linear default bias init: U(-1/sqrt(fan_in), 1/sqrt(fan_in))."""
    bound = 1.0 / (fan_in ** 0.5)
    return jax.random.uniform(key, (1, fan_out), jnp.float32, -bound, bound)


def init_encoder_params(key, input_dim, hidden_dims, latent_dim,
                        weight_dtype=jnp.bfloat16):
    assert len(hidden_dims) == 2, "kernel is specialized for two hidden layers"
    ks = jax.random.split(key, 8)
    h0, h1 = hidden_dims
    params = {
        # hidden layer 1
        "w1": xavier_uniform(ks[0], input_dim, h0).astype(weight_dtype),
        "b1": linear_bias(ks[1], input_dim, h0),
        "g1": jnp.ones((1, h0), jnp.float32),    # BatchNorm1d gamma
        "be1": jnp.zeros((1, h0), jnp.float32),  # BatchNorm1d beta
        # hidden layer 2
        "w2": xavier_uniform(ks[2], h0, h1).astype(weight_dtype),
        "b2": linear_bias(ks[3], h0, h1),
        "g2": jnp.ones((1, h1), jnp.float32),
        "be2": jnp.zeros((1, h1), jnp.float32),
        # FC_mean / FC_var
        "wm": xavier_uniform(ks[4], h1, latent_dim).astype(weight_dtype),
        "bm": linear_bias(ks[5], h1, latent_dim),
        "wv": xavier_uniform(ks[6], h1, latent_dim).astype(weight_dtype),
        "bv": linear_bias(ks[7], h1, latent_dim),
    }
    return params


# --------------------------- pure-JAX reference check ---------------------------

def encoder_reference(x, p):
    """Mirrors the kernel's mixed-precision policy exactly (bf16 weights AND
    bf16 LHS activations feeding each matmul, f32 accumulation), so the
    tolerance check validates the kernel implementation itself."""
    def mm(a, w):
        return jnp.dot(a.astype(jnp.bfloat16), w,
                       preferred_element_type=jnp.float32)

    def block(h, w, b, g, be):
        z = _leaky_relu(mm(h, w) + b)
        mu = jnp.mean(z, axis=0, keepdims=True)
        var = jnp.mean((z - mu) ** 2, axis=0, keepdims=True)  # biased (PyTorch)
        return (z - mu) / jnp.sqrt(var + BN_EPS) * g + be

    h = block(x, p["w1"], p["b1"], p["g1"], p["be1"])
    h = block(h, p["w2"], p["b2"], p["g2"], p["be2"])
    mean = mm(h, p["wm"]) + p["bm"]
    log_var = mm(h, p["wv"]) + p["bv"]
    return mean, log_var


if __name__ == "__main__":
    # Small shapes consistent with the module: x is (batch, input_dim)
    B, INPUT_DIM = 8, 32
    HIDDEN_DIMS = [64, 32]
    LATENT_DIM = 16

    key = jax.random.PRNGKey(0)
    k_x, k_p = jax.random.split(key)
    x = jax.random.normal(k_x, (B, INPUT_DIM), jnp.float32)
    params = init_encoder_params(k_p, INPUT_DIM, HIDDEN_DIMS, LATENT_DIM)

    mean, log_var = jax.jit(encoder_forward)(x, params)
    jax.block_until_ready((mean, log_var))

    # Sanity check against the plain-JAX reference (same mixed-precision policy).
    ref_mean, ref_logvar = encoder_reference(x, params)
    assert mean.shape == (B, LATENT_DIM) and log_var.shape == (B, LATENT_DIM)
    assert jnp.allclose(mean, ref_mean, atol=2e-3, rtol=2e-3)
    assert jnp.allclose(log_var, ref_logvar, atol=2e-3, rtol=2e-3)

    print("KERNEL_OK")
</pallas_src>

<mosaic_0001>
module attributes {stable_mosaic.version = 11 : i64} {
  func.func @_encoder_kernel(%arg0: i32, %arg1: memref<8x128xf32, #tpu.memory_space<vmem>>, %arg2: memref<128x128xbf16, #tpu.memory_space<vmem>>, %arg3: memref<1x128xf32, #tpu.memory_space<vmem>>, %arg4: memref<1x128xf32, #tpu.memory_space<vmem>>, %arg5: memref<1x128xf32, #tpu.memory_space<vmem>>, %arg6: memref<128x128xbf16, #tpu.memory_space<vmem>>, %arg7: memref<1x128xf32, #tpu.memory_space<vmem>>, %arg8: memref<1x128xf32, #tpu.memory_space<vmem>>, %arg9: memref<1x128xf32, #tpu.memory_space<vmem>>, %arg10: memref<128x256xbf16, #tpu.memory_space<vmem>>, %arg11: memref<1x256xf32, #tpu.memory_space<vmem>>, %arg12: memref<8x256xf32, #tpu.memory_space<vmem>>, %arg13: memref<8x128xf32, #tpu.memory_space<vmem>>) attributes {dimension_semantics = [#tpu.dimension_semantics<arbitrary>], iteration_bounds = array<i64: 1>, scalar_prefetch = 0 : i64, scratch_operands = 1 : i64, tpu.core_type = #tpu.core_type<tc>, window_params = [{transform_indices = @transform_0, window_bounds = array<i64: 8, 128>}, {transform_indices = @transform_1, window_bounds = array<i64: 128, 128>}, {pipeline_mode = #tpu.pipeline_mode<synchronous>, transform_indices = @transform_2, window_bounds = array<i64: 1, 128>}, {pipeline_mode = #tpu.pipeline_mode<synchronous>, transform_indices = @transform_3, window_bounds = array<i64: 1, 128>}, {pipeline_mode = #tpu.pipeline_mode<synchronous>, transform_indices = @transform_4, window_bounds = array<i64: 1, 128>}, {pipeline_mode = #tpu.pipeline_mode<synchronous>, transform_indices = @transform_5, window_bounds = array<i64: 128, 128>}, {pipeline_mode = #tpu.pipeline_mode<synchronous>, transform_indices = @transform_6, window_bounds = array<i64: 1, 128>}, {pipeline_mode = #tpu.pipeline_mode<synchronous>, transform_indices = @transform_7, window_bounds = array<i64: 1, 128>}, {pipeline_mode = #tpu.pipeline_mode<synchronous>, transform_indices = @transform_8, window_bounds = array<i64: 1, 128>}, {pipeline_mode = #tpu.pipeline_mode<synchronous>, transform_indices = @transform_9, window_bounds = array<i64: 128, 256>}, {pipeline_mode = #tpu.pipeline_mode<synchronous>, transform_indices = @transform_10, window_bounds = array<i64: 1, 256>}, {pipeline_mode = #tpu.pipeline_mode<synchronous>, transform_indices = @transform_11, window_bounds = array<i64: 8, 256>}]} {
    %c0_i32 = arith.constant 0 : i32
    %0 = arith.cmpi eq, %arg0, %c0_i32 : i32
    %1 = arith.extui %0 : i1 to i32
    %c0_i32_0 = arith.constant 0 : i32
    %2 = arith.cmpi ne, %1, %c0_i32_0 : i32
    scf.if %2 {
      %cst_10 = arith.constant 0.000000e+00 : f32
      %13 = vector.broadcast %cst_10 : f32 to vector<8x128xf32>
      %c0_11 = arith.constant 0 : index
      %c0_12 = arith.constant 0 : index
      %14 = vector.load %arg13[%c0_11, %c0_12] : memref<8x128xf32, #tpu.memory_space<vmem>>, vector<8x128xf32>
      tpu.vector_store %arg13[%c0_11, %c0_12], %13 {strides = array<i32>} : memref<8x128xf32, #tpu.memory_space<vmem>>, vector<8x128xf32>,
    } else {
    }
    %c0 = arith.constant 0 : index
    %c0_1 = arith.constant 0 : index
    %3 = vector.load %arg13[%c0, %c0_1] : memref<8x128xf32, #tpu.memory_space<vmem>>, vector<8x128xf32>
    %c0_2 = arith.constant 0 : index
    %c0_3 = arith.constant 0 : index
    %4 = vector.load %arg1[%c0_2, %c0_3] : memref<8x128xf32, #tpu.memory_space<vmem>>, vector<8x128xf32>
    %5 = arith.truncf %4 : vector<8x128xf32> to vector<8x128xbf16>
    %c0_4 = arith.constant 0 : index
    %c0_5 = arith.constant 0 : index
    %6 = vector.load %arg2[%c0_4, %c0_5] : memref<128x128xbf16, #tpu.memory_space<vmem>>, vector<128x128xbf16>
    %cst = arith.constant dense<0.000000e+00> : vector<8x128xf32>
    %7 = tpu.matmul %5, %6, %cst {dimension_numbers = #tpu.dot_dimension_numbers<[1], [0], [0], [1], [0, 0, 1, 1], [], []>} : vector<8x128xbf16>, vector<128x128xbf16>, vector<8x128xf32> -> vector<8x128xf32>
    %8 = arith.addf %3, %7 : vector<8x128xf32>
    %c0_6 = arith.constant 0 : index
    %c0_7 = arith.constant 0 : index
    %9 = vector.load %arg13[%c0_6, %c0_7] : memref<8x128xf32, #tpu.memory_space<vmem>>, vector<8x128xf32>
    tpu.vector_store %arg13[%c0_6, %c0_7], %8 {strides = array<i32>} : memref<8x128xf32, #tpu.memory_space<vmem>>, vector<8x128xf32>,
    %c0_i32_8 = arith.constant 0 : i32
    %10 = arith.cmpi eq, %arg0, %c0_i32_8 : i32
    %11 = arith.extui %10 : i1 to i32
    %c0_i32_9 = arith.constant 0 : i32
    %12 = arith.cmpi ne, %11, %c0_i32_9 : i32
    scf.if %12 {
      %c0_10 = arith.constant 0 : index
      %c0_11 = arith.constant 0 : index
      %13 = vector.load %arg13[%c0_10, %c0_11] : memref<8x128xf32, #tpu.memory_space<vmem>>, vector<8x128xf32>
      %c0_12 = arith.constant 0 : index
      %c0_13 = arith.constant 0 : index
      %14 = vector.load %arg3[%c0_12, %c0_13] : memref<1x128xf32, #tpu.memory_space<vmem>>, vector<1x128xf32>
      %15 = vector.broadcast %14 : vector<1x128xf32> to vector<8x128xf32>
      %16 = arith.addf %13, %15 : vector<8x128xf32>
      %c0_14 = arith.constant 0 : index
      %c0_15 = arith.constant 0 : index
      %17 = vector.load %arg4[%c0_14, %c0_15] : memref<1x128xf32, #tpu.memory_space<vmem>>, vector<1x128xf32>
      %c0_16 = arith.constant 0 : index
      %c0_17 = arith.constant 0 : index
      %18 = vector.load %arg5[%c0_16, %c0_17] : memref<1x128xf32, #tpu.memory_space<vmem>>, vector<1x128xf32>
      %cst_18 = arith.constant 0.000000e+00 : f32
      %19 = vector.broadcast %cst_18 : f32 to vector<8x128xf32>
      %20 = arith.cmpf oge, %16, %19 : vector<8x128xf32>
      %cst_19 = arith.constant 2.000000e-01 : f32
      %21 = vector.broadcast %cst_19 : f32 to vector<8x128xf32>
      %22 = arith.mulf %21, %16 : vector<8x128xf32>
      %23 = arith.select %20, %16, %22 : vector<8x128xi1>, vector<8x128xf32>
      %cst_20 = arith.constant dense<0.000000e+00> : vector<128xf32>
      %24 = vector.multi_reduction <add>, %23, %cst_20 [0] : vector<8x128xf32> to vector<128xf32>
      %25 = vector.shape_cast %24 : vector<128xf32> to vector<1x128xf32>
      %cst_21 = arith.constant 1.250000e-01 : f32
      %26 = vector.broadcast %cst_21 : f32 to vector<1x128xf32>
      %27 = arith.mulf %25, %26 : vector<1x128xf32>
      %28 = arith.mulf %23, %23 : vector<8x128xf32>
      %cst_22 = arith.constant dense<0.000000e+00> : vector<128xf32>
      %29 = vector.multi_reduction <add>, %28, %cst_22 [0] : vector<8x128xf32> to vector<128xf32>
      %30 = vector.shape_cast %29 : vector<128xf32> to vector<1x128xf32>
      %cst_23 = arith.constant 1.250000e-01 : f32
      %31 = vector.broadcast %cst_23 : f32 to vector<1x128xf32>
      %32 = arith.mulf %30, %31 : vector<1x128xf32>
      %33 = arith.mulf %27, %27 : vector<1x128xf32>
      %34 = arith.subf %32, %33 : vector<1x128xf32>
      %cst_24 = arith.constant 0.000000e+00 : f32
      %35 = vector.broadcast %cst_24 : f32 to vector<1x128xf32>
      %36 = arith.maximumf %34, %35 : vector<1x128xf32>
      %37 = vector.broadcast %27 : vector<1x128xf32> to vector<8x128xf32>
      %38 = arith.subf %23, %37 : vector<8x128xf32>
      %cst_25 = arith.constant 9.99999974E-6 : f32
      %39 = vector.broadcast %cst_25 : f32 to vector<1x128xf32>
      %40 = arith.addf %36, %39 : vector<1x128xf32>
      %41 = math.rsqrt %40 : vector<1x128xf32>
      %42 = vector.broadcast %41 : vector<1x128xf32> to vector<8x128xf32>
      %43 = arith.mulf %38, %42 : vector<8x128xf32>
      %44 = vector.broadcast %17 : vector<1x128xf32> to vector<8x128xf32>
      %45 = arith.mulf %43, %44 : vector<8x128xf32>
      %46 = vector.broadcast %18 : vector<1x128xf32> to vector<8x128xf32>
      %47 = arith.addf %45, %46 : vector<8x128xf32>
      %48 = arith.truncf %47 : vector<8x128xf32> to vector<8x128xbf16>
      %c0_26 = arith.constant 0 : index
      %c0_27 = arith.constant 0 : index
      %49 = vector.load %arg6[%c0_26, %c0_27] : memref<128x128xbf16, #tpu.memory_space<vmem>>, vector<128x128xbf16>
      %cst_28 = arith.constant dense<0.000000e+00> : vector<8x128xf32>
      %50 = tpu.matmul %48, %49, %cst_28 {dimension_numbers = #tpu.dot_dimension_numbers<[1], [0], [0], [1], [0, 0, 1, 1], [], []>} : vector<8x128xbf16>, vector<128x128xbf16>, vector<8x128xf32> -> vector<8x128xf32>
      %c0_29 = arith.constant 0 : index
      %c0_30 = arith.constant 0 : index
      %51 = vector.load %arg7[%c0_29, %c0_30] : memref<1x128xf32, #tpu.memory_space<vmem>>, vector<1x128xf32>
      %52 = vector.broadcast %51 : vector<1x128xf32> to vector<8x128xf32>
      %53 = arith.addf %50, %52 : vector<8x128xf32>
      %c0_31 = arith.constant 0 : index
      %c0_32 = arith.constant 0 : index
      %54 = vector.load %arg8[%c0_31, %c0_32] : memref<1x128xf32, #tpu.memory_space<vmem>>, vector<1x128xf32>
      %c0_33 = arith.constant 0 : index
      %c0_34 = arith.constant 0 : index
      %55 = vector.load %arg9[%c0_33, %c0_34] : memref<1x128xf32, #tpu.memory_space<vmem>>, vector<1x128xf32>
      %cst_35 = arith.constant 0.000000e+00 : f32
      %56 = vector.broadcast %cst_35 : f32 to vector<8x128xf32>
      %57 = arith.cmpf oge, %53, %56 : vector<8x128xf32>
      %cst_36 = arith.constant 2.000000e-01 : f32
      %58 = vector.broadcast %cst_36 : f32 to vector<8x128xf32>
      %59 = arith.mulf %58, %53 : vector<8x128xf32>
      %60 = arith.select %57, %53, %59 : vector<8x128xi1>, vector<8x128xf32>
      %cst_37 = arith.constant dense<0.000000e+00> : vector<128xf32>
      %61 = vector.multi_reduction <add>, %60, %cst_37 [0] : vector<8x128xf32> to vector<128xf32>
      %62 = vector.shape_cast %61 : vector<128xf32> to vector<1x128xf32>
      %cst_38 = arith.constant 1.250000e-01 : f32
      %63 = vector.broadcast %cst_38 : f32 to vector<1x128xf32>
      %64 = arith.mulf %62, %63 : vector<1x128xf32>
      %65 = arith.mulf %60, %60 : vector<8x128xf32>
      %cst_39 = arith.constant dense<0.000000e+00> : vector<128xf32>
      %66 = vector.multi_reduction <add>, %65, %cst_39 [0] : vector<8x128xf32> to vector<128xf32>
      %67 = vector.shape_cast %66 : vector<128xf32> to vector<1x128xf32>
      %cst_40 = arith.constant 1.250000e-01 : f32
      %68 = vector.broadcast %cst_40 : f32 to vector<1x128xf32>
      %69 = arith.mulf %67, %68 : vector<1x128xf32>
      %70 = arith.mulf %64, %64 : vector<1x128xf32>
      %71 = arith.subf %69, %70 : vector<1x128xf32>
      %cst_41 = arith.constant 0.000000e+00 : f32
      %72 = vector.broadcast %cst_41 : f32 to vector<1x128xf32>
      %73 = arith.maximumf %71, %72 : vector<1x128xf32>
      %74 = vector.broadcast %64 : vector<1x128xf32> to vector<8x128xf32>
      %75 = arith.subf %60, %74 : vector<8x128xf32>
      %cst_42 = arith.constant 9.99999974E-6 : f32
      %76 = vector.broadcast %cst_42 : f32 to vector<1x128xf32>
      %77 = arith.addf %73, %76 : vector<1x128xf32>
      %78 = math.rsqrt %77 : vector<1x128xf32>
      %79 = vector.broadcast %78 : vector<1x128xf32> to vector<8x128xf32>
      %80 = arith.mulf %75, %79 : vector<8x128xf32>
      %81 = vector.broadcast %54 : vector<1x128xf32> to vector<8x128xf32>
      %82 = arith.mulf %80, %81 : vector<8x128xf32>
      %83 = vector.broadcast %55 : vector<1x128xf32> to vector<8x128xf32>
      %84 = arith.addf %82, %83 : vector<8x128xf32>
      %85 = arith.truncf %84 : vector<8x128xf32> to vector<8x128xbf16>
      %c0_43 = arith.constant 0 : index
      %c0_44 = arith.constant 0 : index
      %86 = vector.load %arg10[%c0_43, %c0_44] : memref<128x256xbf16, #tpu.memory_space<vmem>>, vector<128x256xbf16>
      %cst_45 = arith.constant dense<0.000000e+00> : vector<8x256xf32>
      %87 = tpu.matmul %85, %86, %cst_45 {dimension_numbers = #tpu.dot_dimension_numbers<[1], [0], [0], [1], [0, 0, 1, 1], [], []>} : vector<8x128xbf16>, vector<128x256xbf16>, vector<8x256xf32> -> vector<8x256xf32>
      %c0_46 = arith.constant 0 : index
      %c0_47 = arith.constant 0 : index
      %88 = vector.load %arg11[%c0_46, %c0_47] : memref<1x256xf32, #tpu.memory_space<vmem>>, vector<1x256xf32>
      %89 = vector.broadcast %88 : vector<1x256xf32> to vector<8x256xf32>
      %90 = arith.addf %87, %89 : vector<8x256xf32>
      %c0_48 = arith.constant 0 : index
      %c0_49 = arith.constant 0 : index
      %91 = vector.load %arg12[%c0_48, %c0_49] : memref<8x256xf32, #tpu.memory_space<vmem>>, vector<8x256xf32>
      tpu.vector_store %arg12[%c0_48, %c0_49], %90 {strides = array<i32>} : memref<8x256xf32, #tpu.memory_space<vmem>>, vector<8x256xf32>,
    } else {
    }
    return
  }
  func.func @transform_0(%arg0: i32) -> (i32, i32) {
    %c0_i32 = arith.constant 0 : i32
    %c0_i32_0 = arith.constant 0 : i32
    return %c0_i32, %arg0 : i32, i32
  }
  func.func @transform_1(%arg0: i32) -> (i32, i32) {
    %c0_i32 = arith.constant 0 : i32
    %c0_i32_0 = arith.constant 0 : i32
    return %arg0, %c0_i32 : i32, i32
  }
  func.func @transform_2(%arg0: i32) -> (i32, i32) {
    %c0_i32 = arith.constant 0 : i32
    %c0_i32_0 = arith.constant 0 : i32
    %c0_i32_1 = arith.constant 0 : i32
    return %c0_i32, %c0_i32_0 : i32, i32
  }
  func.func @transform_3(%arg0: i32) -> (i32, i32) {
    %c0_i32 = arith.constant 0 : i32
    %c0_i32_0 = arith.constant 0 : i32
    %c0_i32_1 = arith.constant 0 : i32
    return %c0_i32, %c0_i32_0 : i32, i32
  }
  func.func @transform_4(%arg0: i32) -> (i32, i32) {
    %c0_i32 = arith.constant 0 : i32
    %c0_i32_0 = arith.constant 0 : i32
    %c0_i32_1 = arith.constant 0 : i32
    return %c0_i32, %c0_i32_0 : i32, i32
  }
  func.func @transform_5(%arg0: i32) -> (i32, i32) {
    %c0_i32 = arith.constant 0 : i32
    %c0_i32_0 = arith.constant 0 : i32
    %c0_i32_1 = arith.constant 0 : i32
    return %c0_i32, %c0_i32_0 : i32, i32
  }
  func.func @transform_6(%arg0: i32) -> (i32, i32) {
    %c0_i32 = arith.constant 0 : i32
    %c0_i32_0 = arith.constant 0 : i32
    %c0_i32_1 = arith.constant 0 : i32
    return %c0_i32, %c0_i32_0 : i32, i32
  }
  func.func @transform_7(%arg0: i32) -> (i32, i32) {
    %c0_i32 = arith.constant 0 : i32
    %c0_i32_0 = arith.constant 0 : i32
    %c0_i32_1 = arith.constant 0 : i32
    return %c0_i32, %c0_i32_0 : i32, i32
  }
  func.func @transform_8(%arg0: i32) -> (i32, i32) {
    %c0_i32 = arith.constant 0 : i32
    %c0_i32_0 = arith.constant 0 : i32
    %c0_i32_1 = arith.constant 0 : i32
    return %c0_i32, %c0_i32_0 : i32, i32
  }
  func.func @transform_9(%arg0: i32) -> (i32, i32) {
    %c0_i32 = arith.constant 0 : i32
    %c0_i32_0 = arith.constant 0 : i32
    %c0_i32_1 = arith.constant 0 : i32
    return %c0_i32, %c0_i32_0 : i32, i32
  }
  func.func @transform_10(%arg0: i32) -> (i32, i32) {
    %c0_i32 = arith.constant 0 : i32
    %c0_i32_0 = arith.constant 0 : i32
    %c0_i32_1 = arith.constant 0 : i32
    return %c0_i32, %c0_i32_0 : i32, i32
  }
  func.func @transform_11(%arg0: i32) -> (i32, i32) {
    %c0_i32 = arith.constant 0 : i32
    %c0_i32_0 = arith.constant 0 : i32
    %c0_i32_1 = arith.constant 0 : i32
    return %c0_i32, %c0_i32_0 : i32, i32
  }
}

</mosaic_0001>

<llo_original>
// kernel: encoder_forward.1
$region0: #{encoder_forward.1}
  #allocation0 [shape = 'u32[]', space=smem, size = 0x4, offset = 0x4, fixed_abs, tag = 'smem constant byte address 0x4 - core index']
  #allocation1 [shape = 'u32[144,128]{1,0:T(1,128)}', space=vmem, size = 0x12000, scoped, tag = 'internal scratch']
  #allocation2 [shape = 'f32[8,128]{1,0:T(8,128)}', space=vmem, size = 0x1000, scoped, tag = 'scratch operand']
  %s0 = inlined_call_operand.vmem [shape: f32[8,128], index: 0, kind: input, shape index: {}]
  %s1 = inlined_call_operand.vmem [shape: bf16[128,128], index: 1, kind: input, shape index: {}]
  %s2 = inlined_call_operand.vmem [shape: f32[1,128], index: 2, kind: input, shape index: {}]
  %s3 = inlined_call_operand.vmem [shape: f32[1,128], index: 3, kind: input, shape index: {}]
  %s4 = inlined_call_operand.vmem [shape: f32[1,128], index: 4, kind: input, shape index: {}]
  %s5 = inlined_call_operand.vmem [shape: bf16[128,128], index: 5, kind: input, shape index: {}]
  %s6 = inlined_call_operand.vmem [shape: f32[1,128], index: 6, kind: input, shape index: {}]
  %s7 = inlined_call_operand.vmem [shape: f32[1,128], index: 7, kind: input, shape index: {}]
  %s8 = inlined_call_operand.vmem [shape: f32[1,128], index: 8, kind: input, shape index: {}]
  %s9 = inlined_call_operand.vmem [shape: bf16[128,256], index: 9, kind: input, shape index: {}]
  %s10 = inlined_call_operand.vmem [shape: f32[1,256], index: 10, kind: input, shape index: {}]
  %s11 = inlined_call_operand.vmem [shape: f32[8,256], index: 11, kind: output, shape index: {}]
  %s12 = sld [smem:[#allocation0]]
  $region62: #{encoder_forward.1} parent=0
    _
  %s14 = ssub.s32 1, %s12
  %s15 = scalar_select 0, %s14, %s12
  // Predicated region
  $region2: #{encoder_forward.1} parent=0 // pred_check
    _
  $region3: #{encoder_forward.1} parent=0 // pred_check_branch
    %17 = sbr.rel (0) target = $region5
  $region4: #{encoder_forward.1} parent=0 // pred_region
    _
  $region5: #{encoder_forward.1} parent=0 // pred_fallthru
    _
  // Predicated region
  $region6: #{encoder_forward.1} parent=0 // pred_check
    _
  $region7: #{encoder_forward.1} parent=0 // pred_check_branch
    %19 = sbr.rel (0) target = $region9
  $region8: #{encoder_forward.1} parent=0 // pred_region
    _
  $region9: #{encoder_forward.1} parent=0 // pred_fallthru
    _
  // Predicated region
  $region10: #{encoder_forward.1} parent=0 // pred_check
    _
  $region11: #{encoder_forward.1} parent=0 // pred_check_branch
    %21 = sbr.rel (0) target = $region13
  $region12: #{encoder_forward.1} parent=0 // pred_region
    _
  $region13: #{encoder_forward.1} parent=0 // pred_fallthru
    _
  // Predicated region
  $region14: #{encoder_forward.1} parent=0 // pred_check
    _
  $region15: #{encoder_forward.1} parent=0 // pred_check_branch
    %23 = sbr.rel (0) target = $region17
  $region16: #{encoder_forward.1} parent=0 // pred_region
    _
  $region17: #{encoder_forward.1} parent=0 // pred_fallthru
    _
  // Predicated region
  $region18: #{encoder_forward.1} parent=0 // pred_check
    _
  $region19: #{encoder_forward.1} parent=0 // pred_check_branch
    %25 = sbr.rel (0) target = $region21
  $region20: #{encoder_forward.1} parent=0 // pred_region
    _
  $region21: #{encoder_forward.1} parent=0 // pred_fallthru
    _
  // Predicated region
  $region22: #{encoder_forward.1} parent=0 // pred_check
    _
  $region23: #{encoder_forward.1} parent=0 // pred_check_branch
    %27 = sbr.rel (0) target = $region25
  $region24: #{encoder_forward.1} parent=0 // pred_region
    _
  $region25: #{encoder_forward.1} parent=0 // pred_fallthru
    _
  // Predicated region
  $region26: #{encoder_forward.1} parent=0 // pred_check
    _
  $region27: #{encoder_forward.1} parent=0 // pred_check_branch
    %29 = sbr.rel (0) target = $region29
  $region28: #{encoder_forward.1} parent=0 // pred_region
    _
  $region29: #{encoder_forward.1} parent=0 // pred_fallthru
    _
  // Predicated region
  $region30: #{encoder_forward.1} parent=0 // pred_check
    _
  $region31: #{encoder_forward.1} parent=0 // pred_check_branch
    %31 = sbr.rel (0) target = $region33
  $region32: #{encoder_forward.1} parent=0 // pred_region
    _
  $region33: #{encoder_forward.1} parent=0 // pred_fallthru
    _
  // Predicated region
  $region34: #{encoder_forward.1} parent=0 // pred_check
    _
  $region35: #{encoder_forward.1} parent=0 // pred_check_branch
    %33 = sbr.rel (0) target = $region37
  $region36: #{encoder_forward.1} parent=0 // pred_region
    _
  $region37: #{encoder_forward.1} parent=0 // pred_fallthru
    _
  // Predicated region
  $region38: #{encoder_forward.1} parent=0 // pred_check
    _
  $region39: #{encoder_forward.1} parent=0 // pred_check_branch
    %35 = sbr.rel (0) target = $region41
  $region40: #{encoder_forward.1} parent=0 // pred_region
    _
  $region41: #{encoder_forward.1} parent=0 // pred_fallthru
    _
  // Predicated region
  $region42: #{encoder_forward.1} parent=0 // pred_check
    _
  $region43: #{encoder_forward.1} parent=0 // pred_check_branch
    %37 = sbr.rel (0) target = $region45
  $region44: #{encoder_forward.1} parent=0 // pred_region
    _
  $region45: #{encoder_forward.1} parent=0 // pred_fallthru
    _
  %p39 = scmp.eq.s32.totalorder 0, 0
  // Predicated region
  $region46: #{encoder_forward.1} parent=0 // pred_check
    %p40 = pneg %p39
  $region47: #{encoder_forward.1} parent=0 // pred_check_branch
    %42 = sbr.rel (%p40) target = $region49
  $region48: #{encoder_forward.1} parent=0 // pred_region
    %43 = vst [vmem:[#allocation2] sm:$0xff] 0.0
  $region49: #{encoder_forward.1} parent=0 // pred_fallthru
    _
  %v44 = vld [vmem:[#allocation2] sm:$0xff]
  %v45 = vld [vmem:[%s0] sm:$0xff]
  %v46 = vpack.c.bf16 %v45, %v45
  %v47 = vld [vmem:[%s1] sm:$0xf]
  %v48 = vld [vmem:[%s1 + $0x4] sm:$0xf]
  %v49 = vld [vmem:[%s1 + $0x8] sm:$0xf]
  %v50 = vld [vmem:[%s1 + $0xc] sm:$0xf]
  %v51 = vld [vmem:[%s1 + $0x10] sm:$0xf]
  %v52 = vld [vmem:[%s1 + $0x14] sm:$0xf]
  %v53 = vld [vmem:[%s1 + $0x18] sm:$0xf]
  %v54 = vld [vmem:[%s1 + $0x1c] sm:$0xf]
  %v55 = vld [vmem:[%s1 + $0x20] sm:$0xf]
  %v56 = vld [vmem:[%s1 + $0x24] sm:$0xf]
  %v57 = vld [vmem:[%s1 + $0x28] sm:$0xf]
  %v58 = vld [vmem:[%s1 + $0x2c] sm:$0xf]
  %v59 = vld [vmem:[%s1 + $0x30] sm:$0xf]
  %v60 = vld [vmem:[%s1 + $0x34] sm:$0xf]
  %v61 = vld [vmem:[%s1 + $0x38] sm:$0xf]
  %v62 = vld [vmem:[%s1 + $0x3c] sm:$0xf]
  %v79 = vunpack.c.l.b16 %v47
  %v80 = vunpack.c.l.b16 %v48
  %v81 = vunpack.c.l.b16 %v49
  %v82 = vunpack.c.l.b16 %v50
  %v83 = vunpack.c.l.b16 %v51
  %v84 = vunpack.c.l.b16 %v52
  %v85 = vunpack.c.l.b16 %v53
  %v86 = vunpack.c.l.b16 %v54
  %v87 = vunpack.c.l.b16 %v55
  %v88 = vunpack.c.l.b16 %v56
  %v89 = vunpack.c.l.b16 %v57
  %v90 = vunpack.c.l.b16 %v58
  %v91 = vunpack.c.l.b16 %v59
  %v92 = vunpack.c.l.b16 %v60
  %v93 = vunpack.c.l.b16 %v61
  %v94 = vunpack.c.l.b16 %v62
  %v95 = vpack.c.b16 %v80, %v79
  %v96 = vpack.c.b16 %v82, %v81
  %v97 = vpack.c.b16 %v84, %v83
  %v98 = vpack.c.b16 %v86, %v85
  %v99 = vpack.c.b16 %v88, %v87
  %v100 = vpack.c.b16 %v90, %v89
  %v101 = vpack.c.b16 %v92, %v91
  %v102 = vpack.c.b16 %v94, %v93
  %111 = vmatprep.subr.bf16.mxu0 0
  %112 = vmatpush1.bf16.msra.mxu0 %v95
  %113 = vmatprep.subr.bf16.mxu0 0
  %114 = vmatpush1.bf16.msra.mxu0 %v96
  %115 = vmatprep.subr.bf16.mxu0 0
  %116 = vmatpush1.bf16.msra.mxu0 %v97
  %117 = vmatprep.subr.bf16.mxu0 0
  %118 = vmatpush1.bf16.msra.mxu0 %v98
  %119 = vmatprep.subr.bf16.mxu0 0
  %120 = vmatpush1.bf16.msra.mxu0 %v99
  %121 = vmatprep.subr.bf16.mxu0 0
  %122 = vmatpush1.bf16.msra.mxu0 %v100
  %123 = vmatprep.subr.bf16.mxu0 0
  %124 = vmatpush1.bf16.msra.mxu0 %v101
  %125 = vmatprep.subr.bf16.mxu0 0
  %126 = vmatpush1.bf16.msra.mxu0 %v102
  %127 = vmatprep.subr.bf16.mxu0 0
  %128 = vmatpush1.bf16.msra.mxu0 0
  %129 = vmatprep.subr.bf16.mxu0 0
  %130 = vmatpush1.bf16.msra.mxu0 0
  %131 = vmatprep.subr.bf16.mxu0 0
  %132 = vmatpush1.bf16.msra.mxu0 0
  %133 = vmatprep.subr.bf16.mxu0 0
  %134 = vmatpush1.bf16.msra.mxu0 0
  %135 = vmatprep.subr.bf16.mxu0 0
  %136 = vmatpush1.bf16.msra.mxu0 0
  %137 = vmatprep.subr.bf16.mxu0 0
  %138 = vmatpush1.bf16.msra.mxu0 0
  %139 = vmatprep.subr.bf16.mxu0 0
  %140 = vmatpush1.bf16.msra.mxu0 0
  %141 = vmatprep.subr.bf16.mxu0 0
  %142 = vmatpush1.bf16.msra.mxu0 0
  %143 = vmatprep.mubr.bf16.mxu0 0
  %144 = vmatmul.mubr.bf16.gmra.mrb[0].mxu0 %v46
  %v145 = vpop.f32.mrb[0].mxu0
  %v146 = vadd.f32 0.0, %v145
  %v147 = vpop.f32.mrb[0].mxu0
  %v148 = vpop.f32.mrb[0].mxu0
  %v149 = vpop.f32.mrb[0].mxu0
  %150 = vdwg.mxu0
  %v151 = vadd.f32 %v44, %v146
  %152 = vst [vmem:[#allocation2] sm:$0xff] %v151
  // Predicated region
  $region50: #{encoder_forward.1} parent=0 // pred_check
    %p153 = pneg %p39
  $region51: #{encoder_forward.1} parent=0 // pred_check_branch
    %155 = sbr.rel (%p153) target = $region53
  $region52: #{encoder_forward.1} parent=0 // pred_region
    %v156 = vld [vmem:[#allocation2] sm:$0xff]
    %v157 = vld [vmem:[%s2] sm:$0x1]
    %v159 = vlaneseq
    %v160 = vshrl.u32 %v159, 7
    %v161 = vsub.s32 0, %v160
    %v162 = vrot.slane %v157, %v161
    %v164 = vadd.f32 %v156, %v162
    %v165 = vld [vmem:[%s3] sm:$0x1]
    %v166 = vld [vmem:[%s4] sm:$0x1]
    %vm167 = vcmp.ge.f32.partialorder %v164, 0.0
    %v168 = vmul.f32 %v164, 0.2
    %v169 = vsel %vm167, %v164, %v168
    %v170 = vrot.slane %v169, 4
    %v171 = vadd.f32 %v169, %v170
    %v172 = vrot.slane %v171, 2
    %v173 = vadd.f32 %v171, %v172
    %v174 = vrot.slane %v173, 1
    %v175 = vadd.f32 %v173, %v174
    %v176 = vmul.f32 %v175, 0.125
    %v177 = vmul.f32 %v169, %v169
    %v178 = vrot.slane %v177, 4
    %v179 = vadd.f32 %v177, %v178
    %v180 = vrot.slane %v179, 2
    %v181 = vadd.f32 %v179, %v180
    %v182 = vrot.slane %v181, 1
    %v183 = vadd.f32 %v181, %v182
    %v184 = vmul.f32 %v183, 0.125
    %v185 = vmul.f32 %v176, %v176
    %v186 = vsub.f32 %v184, %v185
    %v187 = vmax.f32 %v186, 0.0
    %v188 = vsub.f32 %v169, %v176
    %v189 = vadd.f32 %v187, 1e-05
    %v190 = vrsqrt.pop %v189
    %v191 = vmul.f32 %v188, %v190
    %v193 = vlaneseq
    %v194 = vshrl.u32 %v193, 7
    %v195 = vsub.s32 0, %v194
    %v196 = vrot.slane %v165, %v195
    %v198 = vmul.f32 %v191, %v196
    %v200 = vlaneseq
    %v201 = vshrl.u32 %v200, 7
    %v202 = vsub.s32 0, %v201
    %v203 = vrot.slane %v166, %v202
    %v205 = vadd.f32 %v198, %v203
    %v206 = vpack.c.bf16 %v205, %v205
    %v207 = vld [vmem:[%s5] sm:$0xf]
    %v208 = vld [vmem:[%s5 + $0x4] sm:$0xf]
    %v209 = vld [vmem:[%s5 + $0x8] sm:$0xf]
    %v210 = vld [vmem:[%s5 + $0xc] sm:$0xf]
    %v211 = vld [vmem:[%s5 + $0x10] sm:$0xf]
    %v212 = vld [vmem:[%s5 + $0x14] sm:$0xf]
    %v213 = vld [vmem:[%s5 + $0x18] sm:$0xf]
    %v214 = vld [vmem:[%s5 + $0x1c] sm:$0xf]
    %v215 = vld [vmem:[%s5 + $0x20] sm:$0xf]
    %v216 = vld [vmem:[%s5 + $0x24] sm:$0xf]
    %v217 = vld [vmem:[%s5 + $0x28] sm:$0xf]
    %v218 = vld [vmem:[%s5 + $0x2c] sm:$0xf]
    %v219 = vld [vmem:[%s5 + $0x30] sm:$0xf]
    %v220 = vld [vmem:[%s5 + $0x34] sm:$0xf]
    %v221 = vld [vmem:[%s5 + $0x38] sm:$0xf]
    %v222 = vld [vmem:[%s5 + $0x3c] sm:$0xf]
    %v223 = vld [vmem:[%s6] sm:$0x1]
    %v225 = vlaneseq
    %v226 = vshrl.u32 %v225, 7
    %v227 = vsub.s32 0, %v226
    %v228 = vrot.slane %v223, %v227
    %v246 = vunpack.c.l.b16 %v207
    %v247 = vunpack.c.l.b16 %v208
    %v248 = vunpack.c.l.b16 %v209
    %v249 = vunpack.c.l.b16 %v210
    %v250 = vunpack.c.l.b16 %v211
    %v251 = vunpack.c.l.b16 %v212
    %v252 = vunpack.c.l.b16 %v213
    %v253 = vunpack.c.l.b16 %v214
    %v254 = vunpack.c.l.b16 %v215
    %v255 = vunpack.c.l.b16 %v216
    %v256 = vunpack.c.l.b16 %v217
    %v257 = vunpack.c.l.b16 %v218
    %v258 = vunpack.c.l.b16 %v219
    %v259 = vunpack.c.l.b16 %v220
    %v260 = vunpack.c.l.b16 %v221
    %v261 = vunpack.c.l.b16 %v222
    %v262 = vpack.c.b16 %v247, %v246
    %v263 = vpack.c.b16 %v249, %v248
    %v264 = vpack.c.b16 %v251, %v250
    %v265 = vpack.c.b16 %v253, %v252
    %v266 = vpack.c.b16 %v255, %v254
    %v267 = vpack.c.b16 %v257, %v256
    %v268 = vpack.c.b16 %v259, %v258
    %v269 = vpack.c.b16 %v261, %v260
    %278 = vmatprep.subr.bf16.mxu0 0
    %279 = vmatpush1.bf16.msra.mxu0 %v262
    %280 = vmatprep.subr.bf16.mxu0 0
    %281 = vmatpush1.bf16.msra.mxu0 %v263
    %282 = vmatprep.subr.bf16.mxu0 0
    %283 = vmatpush1.bf16.msra.mxu0 %v264
    %284 = vmatprep.subr.bf16.mxu0 0
    %285 = vmatpush1.bf16.msra.mxu0 %v265
    %286 = vmatprep.subr.bf16.mxu0 0
    %287 = vmatpush1.bf16.msra.mxu0 %v266
    %288 = vmatprep.subr.bf16.mxu0 0
    %289 = vmatpush1.bf16.msra.mxu0 %v267
    %290 = vmatprep.subr.bf16.mxu0 0
    %291 = vmatpush1.bf16.msra.mxu0 %v268
    %292 = vmatprep.subr.bf16.mxu0 0
    %293 = vmatpush1.bf16.msra.mxu0 %v269
    %294 = vmatprep.subr.bf16.mxu0 0
    %295 = vmatpush1.bf16.msra.mxu0 0
    %296 = vmatprep.subr.bf16.mxu0 0
    %297 = vmatpush1.bf16.msra.mxu0 0
    %298 = vmatprep.subr.bf16.mxu0 0
    %299 = vmatpush1.bf16.msra.mxu0 0
    %300 = vmatprep.subr.bf16.mxu0 0
    %301 = vmatpush1.bf16.msra.mxu0 0
    %302 = vmatprep.subr.bf16.mxu0 0
    %303 = vmatpush1.bf16.msra.mxu0 0
    %304 = vmatprep.subr.bf16.mxu0 0
    %305 = vmatpush1.bf16.msra.mxu0 0
    %306 = vmatprep.subr.bf16.mxu0 0
    %307 = vmatpush1.bf16.msra.mxu0 0
    %308 = vmatprep.subr.bf16.mxu0 0
    %309 = vmatpush1.bf16.msra.mxu0 0
    %310 = vmatprep.mubr.bf16.mxu0 0
    %311 = vmatmul.mubr.bf16.gmra.mrb[0].mxu0 %v206
    %v312 = vpop.f32.mrb[0].mxu0
    %v313 = vadd.f32 %v228, %v312
    %v314 = vpop.f32.mrb[0].mxu0
    %v315 = vpop.f32.mrb[0].mxu0
    %v316 = vpop.f32.mrb[0].mxu0
    %317 = vdwg.mxu0
    %v318 = vld [vmem:[%s7] sm:$0x1]
    %v319 = vld [vmem:[%s8] sm:$0x1]
    %vm320 = vcmp.ge.f32.partialorder %v313, 0.0
    %v321 = vmul.f32 %v313, 0.2
    %v322 = vsel %vm320, %v313, %v321
    %v323 = vrot.slane %v322, 4
    %v324 = vadd.f32 %v322, %v323
    %v325 = vrot.slane %v324, 2
    %v326 = vadd.f32 %v324, %v325
    %v327 = vrot.slane %v326, 1
    %v328 = vadd.f32 %v326, %v327
    %v329 = vmul.f32 %v328, 0.125
    %v330 = vmul.f32 %v322, %v322
    %v331 = vrot.slane %v330, 4
    %v332 = vadd.f32 %v330, %v331
    %v333 = vrot.slane %v332, 2
    %v334 = vadd.f32 %v332, %v333
    %v335 = vrot.slane %v334, 1
    %v336 = vadd.f32 %v334, %v335
    %v337 = vmul.f32 %v336, 0.125
    %v338 = vmul.f32 %v329, %v329
    %v339 = vsub.f32 %v337, %v338
    %v340 = vmax.f32 %v339, 0.0
    %v341 = vsub.f32 %v322, %v329
    %v342 = vadd.f32 %v340, 1e-05
    %v343 = vrsqrt.pop %v342
    %v344 = vmul.f32 %v341, %v343
    %v346 = vlaneseq
    %v347 = vshrl.u32 %v346, 7
    %v348 = vsub.s32 0, %v347
    %v349 = vrot.slane %v318, %v348
    %v351 = vmul.f32 %v344, %v349
    %v353 = vlaneseq
    %v354 = vshrl.u32 %v353, 7
    %v355 = vsub.s32 0, %v354
    %v356 = vrot.slane %v319, %v355
    %v358 = vadd.f32 %v351, %v356
    %v359 = vpack.c.bf16 %v358, %v358
    %v360 = vld [vmem:[%s9] sm:$0xff]
    %v361 = vld [vmem:[%s9 + $0x8] sm:$0xff]
    %v362 = vld [vmem:[%s9 + $0x10] sm:$0xff]
    %v363 = vld [vmem:[%s9 + $0x18] sm:$0xff]
    %v364 = vld [vmem:[%s9 + $0x20] sm:$0xff]
    %v365 = vld [vmem:[%s9 + $0x28] sm:$0xff]
    %v366 = vld [vmem:[%s9 + $0x30] sm:$0xff]
    %v367 = vld [vmem:[%s9 + $0x38] sm:$0xff]
    %v368 = vld [vmem:[%s9 + $0x40] sm:$0xff]
    %v369 = vld [vmem:[%s9 + $0x48] sm:$0xff]
    %v370 = vld [vmem:[%s9 + $0x50] sm:$0xff]
    %v371 = vld [vmem:[%s9 + $0x58] sm:$0xff]
    %v372 = vld [vmem:[%s9 + $0x60] sm:$0xff]
    %v373 = vld [vmem:[%s9 + $0x68] sm:$0xff]
    %v374 = vld [vmem:[%s9 + $0x70] sm:$0xff]
    %v375 = vld [vmem:[%s9 + $0x78] sm:$0xff]
    %v376 = vld [vmem:[%s10] sm:$0x3]
    %v378 = vlaneseq
    %v379 = vshrl.u32 %v378, 7
    %v380 = vsub.s32 0, %v379
    %v381 = vrot.slane %v376, %v380
    %v382 = vlaneseq
    %v383 = vshrl.u32 %v382, 7
    %v384 = vsub.s32 1, %v383
    %v385 = vrot.slane %v376, %v384
    %v404 = vunpack.c.l.b16 %v360
    %v405 = vunpack.c.h.b16 %v360
    %v406 = vunpack.c.l.b16 %v361
    %v407 = vunpack.c.h.b16 %v361
    %v408 = vunpack.c.l.b16 %v362
    %v409 = vunpack.c.h.b16 %v362
    %v410 = vunpack.c.l.b16 %v363
    %v411 = vunpack.c.h.b16 %v363
    %v412 = vunpack.c.l.b16 %v364
    %v413 = vunpack.c.h.b16 %v364
    %v414 = vunpack.c.l.b16 %v365
    %v415 = vunpack.c.h.b16 %v365
    %v416 = vunpack.c.l.b16 %v366
    %v417 = vunpack.c.h.b16 %v366
    %v418 = vunpack.c.l.b16 %v367
    %v419 = vunpack.c.h.b16 %v367
    %v420 = vunpack.c.l.b16 %v368
    %v421 = vunpack.c.h.b16 %v368
    %v422 = vunpack.c.l.b16 %v369
    %v423 = vunpack.c.h.b16 %v369
    %v424 = vunpack.c.l.b16 %v370
    %v425 = vunpack.c.h.b16 %v370
    %v426 = vunpack.c.l.b16 %v371
    %v427 = vunpack.c.h.b16 %v371
    %v428 = vunpack.c.l.b16 %v372
    %v429 = vunpack.c.h.b16 %v372
    %v430 = vunpack.c.l.b16 %v373
    %v431 = vunpack.c.h.b16 %v373
    %v432 = vunpack.c.l.b16 %v374
    %v433 = vunpack.c.h.b16 %v374
    %v434 = vunpack.c.l.b16 %v375
    %v435 = vunpack.c.h.b16 %v375
    %v436 = vpack.c.b16 %v406, %v404
    %v437 = vpack.c.b16 %v407, %v405
    %v438 = vpack.c.b16 %v410, %v408
    %v439 = vpack.c.b16 %v411, %v409
    %v440 = vpack.c.b16 %v414, %v412
    %v441 = vpack.c.b16 %v415, %v413
    %v442 = vpack.c.b16 %v418, %v416
    %v443 = vpack.c.b16 %v419, %v417
    %v444 = vpack.c.b16 %v422, %v420
    %v445 = vpack.c.b16 %v423, %v421
    %v446 = vpack.c.b16 %v426, %v424
    %v447 = vpack.c.b16 %v427, %v425
    %v448 = vpack.c.b16 %v430, %v428
    %v449 = vpack.c.b16 %v431, %v429
    %v450 = vpack.c.b16 %v434, %v432
    %v451 = vpack.c.b16 %v435, %v433
    %468 = vmatprep.subr.bf16.mxu0 %v437
    %469 = vmatpush1.bf16.msra.mxu0 %v436
    %470 = vmatprep.subr.bf16.mxu0 %v439
    %471 = vmatpush1.bf16.msra.mxu0 %v438
    %472 = vmatprep.subr.bf16.mxu0 %v441
    %473 = vmatpush1.bf16.msra.mxu0 %v440
    %474 = vmatprep.subr.bf16.mxu0 %v443
    %475 = vmatpush1.bf16.msra.mxu0 %v442
    %476 = vmatprep.subr.bf16.mxu0 %v445
    %477 = vmatpush1.bf16.msra.mxu0 %v444
    %478 = vmatprep.subr.bf16.mxu0 %v447
    %479 = vmatpush1.bf16.msra.mxu0 %v446
    %480 = vmatprep.subr.bf16.mxu0 %v449
    %481 = vmatpush1.bf16.msra.mxu0 %v448
    %482 = vmatprep.subr.bf16.mxu0 %v451
    %483 = vmatpush1.bf16.msra.mxu0 %v450
    %484 = vmatprep.subr.bf16.mxu0 0
    %485 = vmatpush1.bf16.msra.mxu0 0
    %486 = vmatprep.subr.bf16.mxu0 0
    %487 = vmatpush1.bf16.msra.mxu0 0
    %488 = vmatprep.subr.bf16.mxu0 0
    %489 = vmatpush1.bf16.msra.mxu0 0
    %490 = vmatprep.subr.bf16.mxu0 0
    %491 = vmatpush1.bf16.msra.mxu0 0
    %492 = vmatprep.subr.bf16.mxu0 0
    %493 = vmatpush1.bf16.msra.mxu0 0
    %494 = vmatprep.subr.bf16.mxu0 0
    %495 = vmatpush1.bf16.msra.mxu0 0
    %496 = vmatprep.subr.bf16.mxu0 0
    %497 = vmatpush1.bf16.msra.mxu0 0
    %498 = vmatprep.subr.bf16.mxu0 0
    %499 = vmatpush1.bf16.msra.mxu0 0
    %500 = vmatprep.mubr.bf16.mxu0 0
    %501 = vmatmul.mubr.bf16.gmra.mrb[0].mxu0 %v359
    %v502 = vpop.f32.mrb[0].mxu0
    %v503 = vadd.f32 %v381, %v502
    %v504 = vpop.f32.mrb[0].mxu0
    %v505 = vadd.f32 %v385, %v504
    %v506 = vpop.f32.mrb[0].mxu0
    %v507 = vpop.f32.mrb[0].mxu0
    %508 = vdwg.mxu0
    %509 = vst [vmem:[%s11] sm:$0xff] %v503
    %510 = vst [vmem:[%s11 + $0x8] sm:$0xff] %v505
  $region53: #{encoder_forward.1} parent=0 // pred_fallthru
    _
  // Predicated region
  $region54: #{encoder_forward.1} parent=0 // pred_check
    _
  $region55: #{encoder_forward.1} parent=0 // pred_check_branch
    %512 = sbr.rel (0) target = $region57
  $region56: #{encoder_forward.1} parent=0 // pred_region
    _
  $region57: #{encoder_forward.1} parent=0 // pred_fallthru
    _
  // Predicated region
  $region58: #{encoder_forward.1} parent=0 // pred_check
    _
  $region59: #{encoder_forward.1} parent=0 // pred_check_branch
    %514 = sbr.rel (0) target = $region61
  $region60: #{encoder_forward.1} parent=0 // pred_region
    _
  $region61: #{encoder_forward.1} parent=0 // pred_fallthru
    _

</llo_original>
